<compile_context>
chip_gen: v6e
topology: v6e:2x2x1
jax: 0.10.0
libtpu: 0.0.40
codegen_flags: <defaults>
</compile_context>

<pallas_src>
import functools
import math

import jax
import jax.numpy as jnp
from jax import lax
from jax.experimental import pallas as pl
from jax.experimental.pallas import tpu as pltpu

ALPHA = 0.25
GAMMA = 2.0
LANES = 128
CHUNK_ROWS = 512           # in-kernel compute sub-chunk (rows); multiple of 32
SMALL_N_FALLBACK = 65536   # below this, fused XLA beats pallas_call fixed cost


def _chip_defaults():
    """(max_tile_rows, num_splits) for the current TPU generation."""
    kind = ""
    try:
        kind = jax.devices()[0].device_kind.lower()
    except Exception:
        pass
    if "v7" in kind:
        return 8192, 2   # 2 TensorCores; 2x2x4 MiB buffering fits 32 MiB scoped VMEM
    if "v6" in kind:
        return 8192, 1   # single TC; 4 MiB blocks, 32 MiB scoped VMEM
    return 4096, 1       # v5e / unknown: 2 MiB blocks, 16 MiB default scoped VMEM


def _focal_block(x, t, alpha, gamma):
    """Elementwise focal-BCE term in f32 (numerically-stable BCEWithLogits)."""
    x = x.astype(jnp.float32)
    t = t.astype(jnp.float32)
    # Share e = exp(-|x|) between the log1p term and the sigmoid (one EUP exp).
    e = jnp.exp(-jnp.abs(x))
    bce = jnp.maximum(x, 0.0) - x * t + jnp.log1p(e)
    r = 1.0 / (1.0 + e)
    p = jnp.where(x >= 0.0, r, e * r)             # == sigmoid(x)
    one_m_p = 1.0 - p
    if gamma == 2.0:                              # VPU squares, no EUP pow
        w_pos = one_m_p * one_m_p
        w_neg = p * p
    else:
        w_pos = one_m_p ** gamma
        w_neg = p ** gamma
    return (t * alpha * w_pos + (1.0 - t) * w_neg) * bce


def _focal_kernel(p_ref, t_ref, out_ref, *, alpha, gamma, chunk_rows, n_chunks):
    i = pl.program_id(1)          # reduction step within this core's range

    @pl.when(i == 0)
    def _():
        out_ref[...] = jnp.zeros_like(out_ref)

    def body(j, acc):
        r0 = pl.multiple_of(j * chunk_rows, chunk_rows)
        x = p_ref[pl.ds(r0, chunk_rows), :]
        t = t_ref[pl.ds(r0, chunk_rows), :]
        f = _focal_block(x, t, alpha, gamma)
        # (chunk, 128) -> (chunk//8, 8, 128) is a pure layout no-op for f32
        # tiling; the axis-0 sum is plain VPU adds, keeping the partial
        # vreg-shaped (no cross-lane XLU work inside the hot loop).
        return acc + jnp.sum(f.reshape(chunk_rows // 8, 8, LANES), axis=0)

    acc = lax.fori_loop(0, n_chunks, body, jnp.zeros((8, LANES), jnp.float32))
    # Output block index ignores i -> it stays resident in VMEM across the
    # reduction axis; accumulate directly into it (no extra scratch).
    out_ref[0, :, :] += acc


def bce_focal_loss(preds, targets, alpha=ALPHA, gamma=GAMMA,
                   min_kernel_elems=SMALL_N_FALLBACK):
    assert preds.shape == targets.shape
    alpha = float(alpha)
    gamma = float(gamma)
    n_elems = preds.size

    max_tile_rows, num_splits = _chip_defaults()
    sub = max(8,
              32 // jnp.dtype(preds.dtype).itemsize,
              32 // jnp.dtype(targets.dtype).itemsize)
    rows = pl.cdiv(n_elems, LANES)

    # Tiny inputs: pallas_call fixed cost dominates; XLA fuses this fine.
    if n_elems < max(min_kernel_elems, 1) or rows < num_splits * sub:
        flat = _focal_block(preds.reshape(-1), targets.reshape(-1), alpha, gamma)
        return jnp.sum(flat) / n_elems

    p_flat = preds.reshape(-1)
    t_flat = targets.reshape(-1)
    pad = rows * LANES - n_elems
    if pad:
        # Rare path: pad by <128 zeros just to a lane multiple; each padded
        # (x=0, t=0) element contributes exactly (0.5**gamma)*ln(2), which is
        # subtracted analytically below (no in-kernel masking).
        p_flat = jnp.pad(p_flat, (0, pad))
        t_flat = jnp.pad(t_flat, (0, pad))
    p2 = p_flat.reshape(rows, LANES)
    t2 = t_flat.reshape(rows, LANES)

    # Tile sizing: floor to whole tiles so no block is ever ragged and no
    # full-array padding copy is needed; the leftover row tail (< one block
    # group) is summed by a fused XLA epilogue over just that slice.
    unit = CHUNK_ROWS if rows >= num_splits * CHUNK_ROWS else sub
    tile_rows = min(max_tile_rows,
                    max(unit, (rows // (num_splits * unit)) * unit))
    chunk_rows = min(CHUNK_ROWS, tile_rows)
    n_chunks = tile_rows // chunk_rows              # exact by construction
    inner_steps = rows // (num_splits * tile_rows)  # >= 1 on this path
    rows_main = num_splits * inner_steps * tile_rows

    kernel = functools.partial(
        _focal_kernel, alpha=alpha, gamma=gamma,
        chunk_rows=chunk_rows, n_chunks=n_chunks)

    n_main = rows_main * LANES
    in_bytes = n_main * (jnp.dtype(preds.dtype).itemsize
                         + jnp.dtype(targets.dtype).itemsize)
    cost = pl.CostEstimate(flops=14 * n_main, transcendentals=2 * n_main,
                           bytes_accessed=in_bytes + num_splits * 8 * LANES * 4)

    partials = pl.pallas_call(
        kernel,
        out_shape=jax.ShapeDtypeStruct((num_splits, 8, LANES), jnp.float32),
        grid_spec=pltpu.PrefetchScalarGridSpec(
            num_scalar_prefetch=0,
            grid=(num_splits, inner_steps),
            in_specs=[
                pl.BlockSpec((tile_rows, LANES),
                             lambda c, i: (c * inner_steps + i, 0)),
                pl.BlockSpec((tile_rows, LANES),
                             lambda c, i: (c * inner_steps + i, 0)),
            ],
            out_specs=pl.BlockSpec((1, 8, LANES), lambda c, i: (c, 0, 0)),
        ),
        compiler_params=pltpu.CompilerParams(
            dimension_semantics=("parallel", "arbitrary")),
        cost_estimate=cost,
    )(p2, t2)

    total = jnp.sum(partials)
    if rows_main < rows:
        # Row tail: fused elementwise + reduce in XLA, reads only this slice.
        total = total + jnp.sum(
            _focal_block(p2[rows_main:], t2[rows_main:], alpha, gamma))
    if pad:
        total = total - pad * (0.5 ** gamma) * math.log(2.0)
    return total / n_elems


def _reference(preds, targets, alpha=ALPHA, gamma=GAMMA):
    x = preds.astype(jnp.float32)
    t = targets.astype(jnp.float32)
    bce = jnp.maximum(x, 0.0) - x * t + jnp.log1p(jnp.exp(-jnp.abs(x)))
    p = jax.nn.sigmoid(x)
    loss = t * alpha * (1.0 - p) ** gamma * bce + (1.0 - t) * p ** gamma * bce
    return jnp.mean(loss)


if __name__ == "__main__":
    key = jax.random.PRNGKey(0)
    k1, k2 = jax.random.split(key)

    # Small NCHW-like logits/targets; force the Pallas kernel path (the default
    # heuristic would route a tensor this small to the fused-XLA fallback).
    preds = jax.random.normal(k1, (2, 4, 16, 16), dtype=jnp.float32)
    targets = (jax.random.uniform(k2, (2, 4, 16, 16)) > 0.5).astype(jnp.float32)
    loss = bce_focal_loss(preds, targets, min_kernel_elems=0)
    jax.block_until_ready(loss)
    ref = _reference(preds, targets)
    assert jnp.allclose(loss, ref, rtol=1e-5, atol=1e-6), (loss, ref)

    # Ragged (not a multiple of 128): exercises the minimal lane padding, the
    # analytic tail correction, and the JAX row-tail epilogue around the kernel.
    p2 = jax.random.normal(k1, (7, 5, 129), dtype=jnp.float32)
    t2 = (jax.random.uniform(k2, (7, 5, 129)) > 0.5).astype(jnp.float32)
    l2 = bce_focal_loss(p2, t2, min_kernel_elems=0)
    jax.block_until_ready(l2)
    r2 = _reference(p2, t2)
    assert jnp.allclose(l2, r2, rtol=1e-5, atol=1e-6), (l2, r2)

    # Tiny input: pure-JAX fallback path.
    p3 = jax.random.normal(k1, (3, 5, 7), dtype=jnp.float32)
    t3 = (jax.random.uniform(k2, (3, 5, 7)) > 0.5).astype(jnp.float32)
    l3 = bce_focal_loss(p3, t3)
    jax.block_until_ready(l3)
    r3 = _reference(p3, t3)
    assert jnp.allclose(l3, r3, rtol=1e-5, atol=1e-6), (l3, r3)

    # Larger case: multi-step reduction + in-kernel 512-row chunk loop.
    p4 = jax.random.normal(k1, (16, 128, 1024), dtype=jnp.float32)
    t4 = (jax.random.uniform(k2, (16, 128, 1024)) > 0.5).astype(jnp.float32)
    l4 = bce_focal_loss(p4, t4)
    jax.block_until_ready(l4)
    r4 = _reference(p4, t4)
    assert jnp.allclose(l4, r4, rtol=2e-5, atol=1e-6), (l4, r4)

    print("KERNEL_OK")
</pallas_src>

<mosaic_0001>
module attributes {stable_mosaic.version = 11 : i64} {
  func.func @_focal_kernel(%arg0: i32, %arg1: i32, %arg2: memref<16x128xf32, #tpu.memory_space<vmem>>, %arg3: memref<16x128xf32, #tpu.memory_space<vmem>>, %arg4: memref<1x8x128xf32, #tpu.memory_space<vmem>>) attributes {dimension_semantics = [#tpu.dimension_semantics<parallel>, #tpu.dimension_semantics<arbitrary>], iteration_bounds = array<i64: 1, 1>, scalar_prefetch = 0 : i64, scratch_operands = 0 : i64, tpu.core_type = #tpu.core_type<tc>, window_params = [{transform_indices = @transform_0, window_bounds = array<i64: 16, 128>}, {transform_indices = @transform_1, window_bounds = array<i64: 16, 128>}, {transform_indices = @transform_2, window_bounds = array<i64: 1, 8, 128>}]} {
    %c0_i32 = arith.constant 0 : i32
    %0 = arith.cmpi eq, %arg1, %c0_i32 : i32
    %1 = arith.extui %0 : i1 to i32
    %c0_i32_0 = arith.constant 0 : i32
    %2 = arith.cmpi ne, %1, %c0_i32_0 : i32
    scf.if %2 {
      %cst_18 = arith.constant 0.000000e+00 : f32
      %49 = vector.broadcast %cst_18 : f32 to vector<1x8x128xf32>
      %c0_19 = arith.constant 0 : index
      %c0_20 = arith.constant 0 : index
      %c0_21 = arith.constant 0 : index
      %50 = vector.load %arg4[%c0_19, %c0_20, %c0_21] : memref<1x8x128xf32, #tpu.memory_space<vmem>>, vector<1x8x128xf32>
      tpu.vector_store %arg4[%c0_19, %c0_20, %c0_21], %49 {strides = array<i32>} : memref<1x8x128xf32, #tpu.memory_space<vmem>>, vector<1x8x128xf32>,
    } else {
    }
    %cst = arith.constant 0.000000e+00 : f32
    %3 = vector.broadcast %cst : f32 to vector<8x128xf32>
    %c0_i32_1 = arith.constant 0 : i32
    %c16_i32 = arith.constant 16 : i32
    %4 = arith.muli %c0_i32_1, %c16_i32 : i32
    %5 = tpu.assume_multiple %4, 16 : i32
    %6 = arith.index_cast %5 : i32 to index
    %c0 = arith.constant 0 : index
    %7 = vector.load %arg2[%6, %c0] : memref<16x128xf32, #tpu.memory_space<vmem>>, vector<16x128xf32>
    %8 = arith.index_cast %5 : i32 to index
    %c0_2 = arith.constant 0 : index
    %9 = vector.load %arg3[%8, %c0_2] : memref<16x128xf32, #tpu.memory_space<vmem>>, vector<16x128xf32>
    %10 = math.absf %7 : vector<16x128xf32>
    %cst_3 = arith.constant 0.000000e+00 : f32
    %11 = vector.broadcast %cst_3 : f32 to vector<16x128xf32>
    %12 = arith.subf %11, %10 : vector<16x128xf32>
    %13 = math.exp %12 : vector<16x128xf32>
    %cst_4 = arith.constant 0.000000e+00 : f32
    %14 = vector.broadcast %cst_4 : f32 to vector<16x128xf32>
    %15 = arith.maximumf %7, %14 : vector<16x128xf32>
    %16 = arith.mulf %7, %9 : vector<16x128xf32>
    %17 = arith.subf %15, %16 : vector<16x128xf32>
    %18 = math.log1p %13 : vector<16x128xf32>
    %19 = arith.addf %17, %18 : vector<16x128xf32>
    %cst_5 = arith.constant 1.000000e+00 : f32
    %20 = vector.broadcast %cst_5 : f32 to vector<16x128xf32>
    %21 = arith.addf %20, %13 : vector<16x128xf32>
    %cst_6 = arith.constant 1.000000e+00 : f32
    %22 = vector.broadcast %cst_6 : f32 to vector<16x128xf32>
    %23 = arith.divf %22, %21 : vector<16x128xf32>
    %cst_7 = arith.constant 0.000000e+00 : f32
    %24 = vector.broadcast %cst_7 : f32 to vector<16x128xf32>
    %25 = arith.cmpf oge, %7, %24 : vector<16x128xf32>
    %26 = arith.mulf %13, %23 : vector<16x128xf32>
    %27 = arith.select %25, %23, %26 : vector<16x128xi1>, vector<16x128xf32>
    %cst_8 = arith.constant 1.000000e+00 : f32
    %28 = vector.broadcast %cst_8 : f32 to vector<16x128xf32>
    %29 = arith.subf %28, %27 : vector<16x128xf32>
    %30 = arith.mulf %29, %29 : vector<16x128xf32>
    %31 = arith.mulf %27, %27 : vector<16x128xf32>
    %cst_9 = arith.constant 2.500000e-01 : f32
    %32 = vector.broadcast %cst_9 : f32 to vector<16x128xf32>
    %33 = arith.mulf %9, %32 : vector<16x128xf32>
    %34 = arith.mulf %33, %30 : vector<16x128xf32>
    %cst_10 = arith.constant 1.000000e+00 : f32
    %35 = vector.broadcast %cst_10 : f32 to vector<16x128xf32>
    %36 = arith.subf %35, %9 : vector<16x128xf32>
    %37 = arith.mulf %36, %31 : vector<16x128xf32>
    %38 = arith.addf %34, %37 : vector<16x128xf32>
    %39 = arith.mulf %38, %19 : vector<16x128xf32>
    %40 = vector.shape_cast %39 : vector<16x128xf32> to vector<2x8x128xf32>
    %cst_11 = arith.constant dense<0.000000e+00> : vector<8x128xf32>
    %41 = vector.multi_reduction <add>, %40, %cst_11 [0] : vector<2x8x128xf32> to vector<8x128xf32>
    %42 = arith.addf %3, %41 : vector<8x128xf32>
    %c1_i32 = arith.constant 1 : i32
    %c0_12 = arith.constant 0 : index
    %c0_13 = arith.constant 0 : index
    %c0_14 = arith.constant 0 : index
    %43 = vector.load %arg4[%c0_12, %c0_13, %c0_14] : memref<1x8x128xf32, #tpu.memory_space<vmem>>, vector<1x8x128xf32>
    %44 = vector.shape_cast %43 : vector<1x8x128xf32> to vector<8x128xf32>
    %45 = arith.addf %44, %42 : vector<8x128xf32>
    %c0_15 = arith.constant 0 : index
    %c0_16 = arith.constant 0 : index
    %c0_17 = arith.constant 0 : index
    %46 = vector.load %arg4[%c0_15, %c0_16, %c0_17] : memref<1x8x128xf32, #tpu.memory_space<vmem>>, vector<1x8x128xf32>
    %47 = vector.shape_cast %46 : vector<1x8x128xf32> to vector<8x128xf32>
    %48 = vector.shape_cast %45 : vector<8x128xf32> to vector<1x8x128xf32>
    tpu.vector_store %arg4[%c0_15, %c0_16, %c0_17], %48 {strides = array<i32>} : memref<1x8x128xf32, #tpu.memory_space<vmem>>, vector<1x8x128xf32>,
    return
  }
  func.func @transform_0(%arg0: i32, %arg1: i32) -> (i32, i32) {
    %c1_i32 = arith.constant 1 : i32
    %0 = arith.muli %arg0, %c1_i32 : i32
    %1 = arith.addi %0, %arg1 : i32
    %c0_i32 = arith.constant 0 : i32
    %c0_i32_0 = arith.constant 0 : i32
    return %1, %c0_i32 : i32, i32
  }
  func.func @transform_1(%arg0: i32, %arg1: i32) -> (i32, i32) {
    %c1_i32 = arith.constant 1 : i32
    %0 = arith.muli %arg0, %c1_i32 : i32
    %1 = arith.addi %0, %arg1 : i32
    %c0_i32 = arith.constant 0 : i32
    %c0_i32_0 = arith.constant 0 : i32
    return %1, %c0_i32 : i32, i32
  }
  func.func @transform_2(%arg0: i32, %arg1: i32) -> (i32, i32, i32) {
    %c0_i32 = arith.constant 0 : i32
    %c0_i32_0 = arith.constant 0 : i32
    %c0_i32_1 = arith.constant 0 : i32
    return %arg0, %c0_i32, %c0_i32_0 : i32, i32, i32
  }
}

</mosaic_0001>

<llo_original>
// kernel: tpu_custom_call.1
$region0: #{tpu_custom_call.1}
  #allocation0 [shape = 'u32[]', space=smem, size = 0x4, offset = 0x4, fixed_abs, tag = 'smem constant byte address 0x4 - core index']
  #allocation1 [shape = 'u32[144,128]{1,0:T(1,128)}', space=vmem, size = 0x12000, scoped, tag = 'internal scratch']
  %s0 = inlined_call_operand.hbm [shape: f32[16,128], index: 0, kind: input, shape index: {}]
  %s1 = inlined_call_operand.hbm [shape: f32[16,128], index: 1, kind: input, shape index: {}]
  %s2 = inlined_call_operand.hbm [shape: f32[1,8,128], index: 2, kind: output, shape index: {}]
  %s3 = sld [smem:[#allocation0]]
  $region30: #{tpu_custom_call.1} parent=0
    _
  %s5 = ssub.s32 1, %s3
  %s6 = scalar_select 0, %s5, %s3
  $region1: #{tpu_custom_call.1} parent=0
    #allocation2 [shape = 'u8[8192]{0}', space=vmem, size = 0x2000, scoped, tag = 'input window, operand 0, single buffered']
    #allocation3 [shape = 's32[1]{0}', space=sflag, size = 0x4, scoped, tag = 'scoped memory for tpu_custom_call.1']
    #allocation4 [shape = 's32[1]{0}', space=sflag, size = 0x4, scoped, tag = 'scoped memory for tpu_custom_call.1']
    #allocation5 [shape = 'u8[8192]{0}', space=vmem, size = 0x2000, scoped, tag = 'input window, operand 1, single buffered']
    #allocation6 [shape = 's32[1]{0}', space=sflag, size = 0x4, scoped, tag = 'scoped memory for tpu_custom_call.1']
    #allocation7 [shape = 'u8[4096]{0}', space=vmem, size = 0x1000, scoped, tag = 'output window, operand 0, single buffered']
    %7 = vsyncpa [#allocation3], 0
    %8 = vsyncpa [#allocation6], 0
    %9 = vsyncpa [#allocation4], 0
    // Predicated region
    $region2: #{tpu_custom_call.1} parent=1 // pred_check
      _
    $region3: #{tpu_custom_call.1} parent=1 // pred_check_branch
      %11 = sbr.rel (0) target = $region5
    $region4: #{tpu_custom_call.1} parent=1 // pred_region
      %s12 = sadd.s32 0, 0
      %s13 = smul.u32 2, %s12
      %s15 = ssub.s32 256, 256
      %16 = vsyncadd [#allocation3], %s15
      %s17 = smul.addr %s13, 128
      %s18 = scalar_lea.hbm %s0, %s17
      %s19 = sshll.u32 [#allocation2], 4
      %s20 = int_to_ptr.vmem [resolvable:$true] %s19
      %25 = dma.hbm_to_vmem [thread:$0]  %s18, 256, %s20, [#allocation3], 128, 128, 8
    $region5: #{tpu_custom_call.1} parent=1 // pred_fallthru
      _
    // Predicated region
    $region6: #{tpu_custom_call.1} parent=1 // pred_check
      _
    $region7: #{tpu_custom_call.1} parent=1 // pred_check_branch
      %27 = sbr.rel (0) target = $region9
    $region8: #{tpu_custom_call.1} parent=1 // pred_region
      %s28 = sadd.s32 0, 0
      %s29 = smul.u32 2, %s28
      %s31 = ssub.s32 256, 256
      %32 = vsyncadd [#allocation6], %s31
      %s33 = smul.addr %s29, 128
      %s34 = scalar_lea.hbm %s1, %s33
      %s35 = sshll.u32 [#allocation5], 4
      %s36 = int_to_ptr.vmem [resolvable:$true] %s35
      %41 = dma.hbm_to_vmem [thread:$0]  %s34, 256, %s36, [#allocation6], 128, 128, 8
    $region9: #{tpu_custom_call.1} parent=1 // pred_fallthru
      _
    // Predicated region
    $region10: #{tpu_custom_call.1} parent=1 // pred_check
      _
    $region11: #{tpu_custom_call.1} parent=1 // pred_check_branch
      %43 = sbr.rel (0) target = $region13
    $region12: #{tpu_custom_call.1} parent=1 // pred_region
      %44 = dma.done [#allocation3], 256
    $region13: #{tpu_custom_call.1} parent=1 // pred_fallthru
      _
    // Predicated region
    $region14: #{tpu_custom_call.1} parent=1 // pred_check
      _
    $region15: #{tpu_custom_call.1} parent=1 // pred_check_branch
      %46 = sbr.rel (0) target = $region17
    $region16: #{tpu_custom_call.1} parent=1 // pred_region
      %47 = dma.done [#allocation6], 256
    $region17: #{tpu_custom_call.1} parent=1 // pred_fallthru
      _
    %s48 = sadd.s32 0, 0
    %s49 = smul.u32 2, %s48
    %s50 = sadd.s32 0, 0
    %s51 = smul.u32 2, %s50
    %p52 = scmp.eq.s32.totalorder 0, 0
    // Predicated region
    $region18: #{tpu_custom_call.1} parent=1 // pred_check
      %p53 = pneg %p52
    $region19: #{tpu_custom_call.1} parent=1 // pred_check_branch
      %55 = sbr.rel (%p53) target = $region21
    $region20: #{tpu_custom_call.1} parent=1 // pred_region
      %56 = vst [vmem:[#allocation7] sm:$0xff] 0.0
    $region21: #{tpu_custom_call.1} parent=1 // pred_fallthru
      _
    %v57 = vld [vmem:[#allocation2] sm:$0xff]
    %v58 = vld [vmem:[#allocation2 + $0x8] sm:$0xff]
    %v59 = vld [vmem:[#allocation5] sm:$0xff]
    %v60 = vld [vmem:[#allocation5 + $0x8] sm:$0xff]
    %v61 = vand.u32 2147483647, %v57
    %v62 = vand.u32 2147483647, %v58
    %v63 = vsub.f32 0.0, %v61
    %v64 = vsub.f32 0.0, %v62
    %v65 = vmul.f32 %v63, 1.442695
    %v66 = vpow.pop %v65
    %v67 = vmul.f32 %v64, 1.442695
    %v68 = vpow.pop %v67
    %v69 = vmax.f32 %v57, 0.0
    %v70 = vmax.f32 %v58, 0.0
    %v71 = vmul.f32 %v57, %v59
    %v72 = vmul.f32 %v58, %v60
    %v73 = vsub.f32 %v69, %v71
    %v74 = vsub.f32 %v70, %v72
    %v75 = vadd.f32 %v66, 1.0
    %v76 = vlog2.pop %v75
    %v77 = vmul.f32 %v76, 0.6931472
    %v78 = vmul.f32 -0.5, %v66
    %v79 = vadd.f32 %v78, 1.0
    %v80 = vmul.f32 %v79, %v66
    %v81 = vand.u32 2147483647, %v66
    %vm82 = vcmp.lt.f32.partialorder %v81, 0.0004427343
    %v83 = vsel %vm82, %v80, %v77
    %v84 = vadd.f32 %v68, 1.0
    %v85 = vlog2.pop %v84
    %v86 = vmul.f32 %v85, 0.6931472
    %v87 = vmul.f32 -0.5, %v68
    %v88 = vadd.f32 %v87, 1.0
    %v89 = vmul.f32 %v88, %v68
    %v90 = vand.u32 2147483647, %v68
    %vm91 = vcmp.lt.f32.partialorder %v90, 0.0004427343
    %v92 = vsel %vm91, %v89, %v86
    %v93 = vadd.f32 %v73, %v83
    %v94 = vadd.f32 %v74, %v92
    %v95 = vadd.f32 %v66, 1.0
    %v96 = vadd.f32 %v68, 1.0
    %v97 = vrcp.pop %v95
    %v98 = vmul.f32 1.0, %v97
    %v99 = vrcp.pop %v96
    %v100 = vmul.f32 1.0, %v99
    %vm101 = vcmp.ge.f32.partialorder %v57, 0.0
    %vm102 = vcmp.ge.f32.partialorder %v58, 0.0
    %v103 = vmul.f32 %v66, %v98
    %v104 = vmul.f32 %v68, %v100
    %v105 = vsel %vm101, %v98, %v103
    %v106 = vsel %vm102, %v100, %v104
    %v107 = vsub.f32 1.0, %v105
    %v108 = vsub.f32 1.0, %v106
    %v109 = vmul.f32 %v107, %v107
    %v110 = vmul.f32 %v108, %v108
    %v111 = vmul.f32 %v105, %v105
    %v112 = vmul.f32 %v106, %v106
    %v113 = vmul.f32 %v59, 0.25
    %v114 = vmul.f32 %v60, 0.25
    %v115 = vmul.f32 %v113, %v109
    %v116 = vmul.f32 %v114, %v110
    %v117 = vsub.f32 1.0, %v59
    %v118 = vsub.f32 1.0, %v60
    %v119 = vmul.f32 %v117, %v111
    %v120 = vmul.f32 %v118, %v112
    %v121 = vadd.f32 %v115, %v119
    %v122 = vadd.f32 %v116, %v120
    %v123 = vmul.f32 %v121, %v93
    %v124 = vmul.f32 %v122, %v94
    %v125 = vadd.f32 %v123, %v124
    %v126 = vadd.f32 %v125, 0.0
    %v127 = vld [vmem:[#allocation7] sm:$0xff]
    %v128 = vadd.f32 %v127, %v126
    %129 = vst [vmem:[#allocation7] sm:$0xff] %v128
    // Predicated region
    $region22: #{tpu_custom_call.1} parent=1 // pred_check
      _
    $region23: #{tpu_custom_call.1} parent=1 // pred_check_branch
      %131 = sbr.rel (0) target = $region25
    $region24: #{tpu_custom_call.1} parent=1 // pred_region
      %s133 = ssub.s32 128, 128
      %134 = vsyncadd [#allocation4], %s133
      %s136 = sshll.u32 [#allocation7], 4
      %s137 = int_to_ptr.vmem [resolvable:$true] %s136
      %139 = dma.vmem_to_hbm [thread:$0]  %s137, 128, %s2, [#allocation4]
    $region25: #{tpu_custom_call.1} parent=1 // pred_fallthru
      _
    // Predicated region
    $region26: #{tpu_custom_call.1} parent=1 // pred_check
      _
    $region27: #{tpu_custom_call.1} parent=1 // pred_check_branch
      %141 = sbr.rel (0) target = $region29
    $region28: #{tpu_custom_call.1} parent=1 // pred_region
      %142 = dma.done [#allocation4], 128
    $region29: #{tpu_custom_call.1} parent=1 // pred_fallthru
      _
    %143 = vsyncpa [#allocation3], 1
    %144 = vsyncpa [#allocation6], 1
    %145 = vsyncpa [#allocation4], 1

</llo_original>
